<compile_context>
chip_gen: v7x
topology: tpu7x:2x2x1
jax: 0.10.0
libtpu: 0.0.40
codegen_flags: <defaults>
</compile_context>

<pallas_src>
import jax
import jax.numpy as jnp
from jax.experimental import pallas as pl
from jax.experimental.pallas import tpu as pltpu

IN_FEATURES = 784
OUT_FEATURES = 10
N_MXU = 128            # MXU-aligned matmul width (weight zero-padded 10 -> 128)
N_STORE = 16           # HBM output slab width (f32); wrapper slices to 10
DEFAULT_TILE_B = 2048  # ~17 MiB double-buffered VMEM at f32 x — fits all gens w/ 32 MiB limit


def _round_up(x, m):
    return ((x + m - 1) // m) * m


def _linear_kernel(x_ref, w_ref, b_ref, o_ref):
    # x_ref: (tb, 784) in the caller's dtype (f32 or bf16) — cast to bf16 on the
    #        VPU (free under the DMA; avoids a separate wrapper-side cast pass).
    # w_ref: (784, 128) bf16, VMEM-resident.    b_ref: (1, 16) f32, VMEM-resident.
    # o_ref: (tb, 16) f32.
    xb = x_ref[...].astype(jnp.bfloat16)
    acc = jnp.dot(xb, w_ref[...], preferred_element_type=jnp.float32)   # (tb, 128) f32
    o_ref[...] = (acc[:, :N_STORE] + b_ref[...]).astype(o_ref.dtype)


def prepare_params(weight, bias):
    """One-time parameter prep (call at model-load time, not per forward):
       - transpose PyTorch-layout (10, 784) weight to (784, 10)
       - zero-pad output dim 10 -> 128 (MXU-aligned) and cast to bf16
       - zero-pad bias to (1, 16) f32 (the stored output width)
    """
    w_t = weight.T.astype(jnp.bfloat16)                                    # (784, 10)
    w_pad = (jnp.zeros((IN_FEATURES, N_MXU), jnp.bfloat16)
             .at[:, :OUT_FEATURES].set(w_t))                               # (784, 128)
    b_pad = (jnp.zeros((1, N_STORE), jnp.float32)
             .at[0, :OUT_FEATURES].set(bias.astype(jnp.float32)))          # (1, 16)
    return w_pad, b_pad


def _choose_tile_b(B, tile_b):
    if B <= 16:
        return _round_up(B, 8)
    # At least two batch tiles so v7x's dual TensorCores both get work; the one
    # extra ~0.35us grid step is negligible on single-TC v5e/v6e.
    half = _round_up(-(-B // 2), 16)
    return min(tile_b, half)


def mnist_linear_forward(x, w_pad, b_pad, tile_b=DEFAULT_TILE_B):
    """x: (B, 1, 28, 28) or (B, 784), any float dtype; w_pad/b_pad from
       prepare_params().  Returns (B, 10) float32, matching MNISTLinear.forward.
    """
    B = x.shape[0]
    x2d = x.reshape(B, IN_FEATURES)   # keep arriving dtype; kernel casts to bf16

    tb = _choose_tile_b(B, tile_b)
    grid = pl.cdiv(B, tb)             # final partial block handled by Pallas

    out = pl.pallas_call(
        _linear_kernel,
        out_shape=jax.ShapeDtypeStruct((B, N_STORE), jnp.float32),
        grid=(grid,),
        in_specs=[
            pl.BlockSpec((tb, IN_FEATURES), lambda i: (i, 0)),     # streamed x tiles
            pl.BlockSpec((IN_FEATURES, N_MXU), lambda i: (0, 0)),  # resident weight
            pl.BlockSpec((1, N_STORE), lambda i: (0, 0)),          # resident bias
        ],
        out_specs=pl.BlockSpec((tb, N_STORE), lambda i: (i, 0)),
        compiler_params=pltpu.CompilerParams(
            dimension_semantics=("parallel",),
            vmem_limit_bytes=32 * 1024 * 1024,   # big tiles fit on v5e too; <= v7x ceiling
        ),
    )(x2d, w_pad, b_pad)

    return out[:, :OUT_FEATURES]


if __name__ == "__main__":
    key = jax.random.PRNGKey(0)
    kx, kw, kb, kx2 = jax.random.split(key, 4)

    # Deterministic parameter init matching nn.Linear(784, 10, bias=True)
    bound = 1.0 / (784.0 ** 0.5)
    weight = jax.random.uniform(kw, (10, 784), jnp.float32, -bound, bound)
    bias = jax.random.uniform(kb, (10,), jnp.float32, -bound, bound)

    # One-time param prep (transpose + pad + bf16), hoisted out of the forward.
    w_pad, b_pad = prepare_params(weight, bias)

    def check(x):
        B = x.shape[0]
        out = jax.block_until_ready(mnist_linear_forward(x, w_pad, b_pad))
        # Reference with the same bf16 input/weight rounding, f32 accumulation.
        x32 = x.reshape(B, IN_FEATURES).astype(jnp.bfloat16).astype(jnp.float32)
        w32 = weight.astype(jnp.bfloat16).astype(jnp.float32)
        ref = x32 @ w32.T + bias
        assert out.shape == (B, OUT_FEATURES), out.shape
        assert bool(jnp.isfinite(out).all()), "non-finite output"
        assert jnp.allclose(out, ref, atol=2e-3, rtol=2e-3), "mismatch vs reference"
        return out

    # Small MNIST-like batch, NCHW (same layout as the PyTorch pipeline).
    x_small = jax.random.normal(kx, (8, 1, 28, 28), dtype=jnp.float32)
    check(x_small)

    # Non-multiple-of-tile batch: exercises the two-tile split (v7x path) and the
    # partial final block (no jnp.pad of x).
    x_big = jax.random.normal(kx2, (520, 1, 28, 28), dtype=jnp.float32)
    check(x_big)

    print("KERNEL_OK")
</pallas_src>

<mosaic_0001>
module attributes {stable_mosaic.version = 11 : i64} {
  func.func @_linear_kernel(%arg0: i32, %arg1: memref<8x784xf32, #tpu.memory_space<vmem>>, %arg2: memref<784x128xbf16, #tpu.memory_space<vmem>>, %arg3: memref<1x16xf32, #tpu.memory_space<vmem>>, %arg4: memref<8x16xf32, #tpu.memory_space<vmem>>) attributes {dimension_semantics = [#tpu.dimension_semantics<parallel>], iteration_bounds = array<i64: 1>, scalar_prefetch = 0 : i64, scratch_operands = 0 : i64, tpu.core_type = #tpu.core_type<tc>, window_params = [{transform_indices = @transform_0, window_bounds = array<i64: 8, 784>}, {pipeline_mode = #tpu.pipeline_mode<synchronous>, transform_indices = @transform_1, window_bounds = array<i64: 784, 128>}, {pipeline_mode = #tpu.pipeline_mode<synchronous>, transform_indices = @transform_2, window_bounds = array<i64: 1, 16>}, {transform_indices = @transform_3, window_bounds = array<i64: 8, 16>}]} {
    %c0 = arith.constant 0 : index
    %c0_0 = arith.constant 0 : index
    %0 = vector.load %arg1[%c0, %c0_0] : memref<8x784xf32, #tpu.memory_space<vmem>>, vector<8x784xf32>
    %1 = arith.truncf %0 : vector<8x784xf32> to vector<8x784xbf16>
    %c0_1 = arith.constant 0 : index
    %c0_2 = arith.constant 0 : index
    %2 = vector.load %arg2[%c0_1, %c0_2] : memref<784x128xbf16, #tpu.memory_space<vmem>>, vector<784x128xbf16>
    %cst = arith.constant dense<0.000000e+00> : vector<8x128xf32>
    %3 = tpu.matmul %1, %2, %cst {dimension_numbers = #tpu.dot_dimension_numbers<[1], [0], [0], [1], [0, 0, 1, 1], [], []>} : vector<8x784xbf16>, vector<784x128xbf16>, vector<8x128xf32> -> vector<8x128xf32>
    %4 = vector.extract_strided_slice %3 {offsets = [0, 0], sizes = [8, 16], strides = [1, 1]} : vector<8x128xf32> to vector<8x16xf32>
    %c0_3 = arith.constant 0 : index
    %c0_4 = arith.constant 0 : index
    %5 = vector.load %arg3[%c0_3, %c0_4] : memref<1x16xf32, #tpu.memory_space<vmem>>, vector<1x16xf32>
    %6 = vector.broadcast %5 : vector<1x16xf32> to vector<8x16xf32>
    %7 = arith.addf %4, %6 : vector<8x16xf32>
    %c0_5 = arith.constant 0 : index
    %c0_6 = arith.constant 0 : index
    %8 = vector.load %arg4[%c0_5, %c0_6] : memref<8x16xf32, #tpu.memory_space<vmem>>, vector<8x16xf32>
    tpu.vector_store %arg4[%c0_5, %c0_6], %7 {strides = array<i32>} : memref<8x16xf32, #tpu.memory_space<vmem>>, vector<8x16xf32>,
    return
  }
  func.func @transform_0(%arg0: i32) -> (i32, i32) {
    %c0_i32 = arith.constant 0 : i32
    %c0_i32_0 = arith.constant 0 : i32
    return %arg0, %c0_i32 : i32, i32
  }
  func.func @transform_1(%arg0: i32) -> (i32, i32) {
    %c0_i32 = arith.constant 0 : i32
    %c0_i32_0 = arith.constant 0 : i32
    %c0_i32_1 = arith.constant 0 : i32
    return %c0_i32, %c0_i32_0 : i32, i32
  }
  func.func @transform_2(%arg0: i32) -> (i32, i32) {
    %c0_i32 = arith.constant 0 : i32
    %c0_i32_0 = arith.constant 0 : i32
    %c0_i32_1 = arith.constant 0 : i32
    return %c0_i32, %c0_i32_0 : i32, i32
  }
  func.func @transform_3(%arg0: i32) -> (i32, i32) {
    %c0_i32 = arith.constant 0 : i32
    %c0_i32_0 = arith.constant 0 : i32
    return %arg0, %c0_i32 : i32, i32
  }
}

</mosaic_0001>

<llo_original>
// kernel: tpu_custom_call.1
$region0: #{tpu_custom_call.1}
  #allocation0 [shape = 'u32[]', space=smem, size = 0x4, offset = 0x4, fixed_abs, tag = 'smem constant byte address 0x4 - core index']
  #allocation1 [shape = 'u32[144,128]{1,0:T(1,128)}', space=vmem, size = 0x12000, scoped, tag = 'internal scratch']
  %s0 = inlined_call_operand.hbm [shape: f32[8,784], index: 0, kind: input, shape index: {}]
  %s1 = inlined_call_operand.hbm [shape: bf16[784,128], index: 1, kind: input, shape index: {}]
  %s2 = inlined_call_operand.vmem [shape: f32[1,16], index: 2, kind: input, shape index: {}]
  %s3 = inlined_call_operand.hbm [shape: f32[8,16], index: 3, kind: output, shape index: {}]
  %s4 = sld [smem:[#allocation0]]
  $region30: #{tpu_custom_call.1} parent=0
    _
  %s6 = ssub.s32 1, %s4
  %s7 = scalar_select 0, %s6, %s4
  $region1: #{tpu_custom_call.1} parent=0
    #allocation2 [shape = 'u8[28672]{0}', space=vmem, size = 0x7000, scoped, tag = 'input window, operand 0, single buffered']
    #allocation3 [shape = 's32[1]{0}', space=sflag, size = 0x4, scoped, tag = 'scoped memory for tpu_custom_call.1']
    #allocation4 [shape = 's32[1]{0}', space=sflag, size = 0x4, scoped, tag = 'scoped memory for tpu_custom_call.1']
    #allocation5 [shape = 'u8[200704]{0}', space=vmem, size = 0x31000, scoped, tag = 'input window, operand 1, single buffered']
    #allocation6 [shape = 's32[1]{0}', space=sflag, size = 0x4, scoped, tag = 'scoped memory for tpu_custom_call.1']
    #allocation7 [shape = 'u8[4096]{0}', space=vmem, size = 0x1000, scoped, tag = 'output window, operand 0, single buffered']
    %8 = vsyncpa [#allocation3], 0
    %9 = vsyncpa [#allocation6], 0
    %10 = vsyncpa [#allocation4], 0
    // Predicated region
    $region2: #{tpu_custom_call.1} parent=1 // pred_check
      _
    $region3: #{tpu_custom_call.1} parent=1 // pred_check_branch
      %12 = sbr.rel (0) target = $region5
    $region4: #{tpu_custom_call.1} parent=1 // pred_region
      %s14 = ssub.s32 896, 896
      %15 = vsyncadd [#allocation3], %s14
      %s17 = sshll.u32 [#allocation2], 4
      %s18 = int_to_ptr.vmem [resolvable:$true] %s17
      %20 = dma.hbm_to_vmem [thread:$0]  %s0, 896, %s18, [#allocation3]
    $region5: #{tpu_custom_call.1} parent=1 // pred_fallthru
      _
    // Predicated region
    $region6: #{tpu_custom_call.1} parent=1 // pred_check
      _
    $region7: #{tpu_custom_call.1} parent=1 // pred_check_branch
      %22 = sbr.rel (0) target = $region9
    $region8: #{tpu_custom_call.1} parent=1 // pred_region
      %s24 = ssub.s32 6272, 6272
      %25 = vsyncadd [#allocation6], %s24
      %s26 = sshll.u32 [#allocation5], 4
      %s27 = int_to_ptr.vmem [resolvable:$true] %s26
      %32 = dma.hbm_to_vmem [thread:$0]  %s1, 6272, %s27, [#allocation6], 64, 64, 4
    $region9: #{tpu_custom_call.1} parent=1 // pred_fallthru
      _
    // Predicated region
    $region10: #{tpu_custom_call.1} parent=1 // pred_check
      _
    $region11: #{tpu_custom_call.1} parent=1 // pred_check_branch
      %34 = sbr.rel (0) target = $region13
    $region12: #{tpu_custom_call.1} parent=1 // pred_region
      _
    $region13: #{tpu_custom_call.1} parent=1 // pred_fallthru
      _
    // Predicated region
    $region14: #{tpu_custom_call.1} parent=1 // pred_check
      _
    $region15: #{tpu_custom_call.1} parent=1 // pred_check_branch
      %36 = sbr.rel (0) target = $region17
    $region16: #{tpu_custom_call.1} parent=1 // pred_region
      %37 = dma.done [#allocation3], 896
    $region17: #{tpu_custom_call.1} parent=1 // pred_fallthru
      _
    // Predicated region
    $region18: #{tpu_custom_call.1} parent=1 // pred_check
      _
    $region19: #{tpu_custom_call.1} parent=1 // pred_check_branch
      %39 = sbr.rel (0) target = $region21
    $region20: #{tpu_custom_call.1} parent=1 // pred_region
      %40 = dma.done [#allocation6], 6272
    $region21: #{tpu_custom_call.1} parent=1 // pred_fallthru
      _
    %v42 = vld [vmem:[#allocation2] sm:$0xff]
    %v43 = vld [vmem:[#allocation2 + $0x8] sm:$0xff]
    %v44 = vld [vmem:[#allocation2 + $0x10] sm:$0xff]
    %v45 = vld [vmem:[#allocation2 + $0x18] sm:$0xff]
    %v46 = vld [vmem:[#allocation2 + $0x20] sm:$0xff]
    %v47 = vld [vmem:[#allocation2 + $0x28] sm:$0xff]
    %v48 = vld [vmem:[#allocation2 + $0x30] sm:$0xff]
    %v49 = vpack.c.bf16 %v42, %v42
    %v50 = vpack.c.bf16 %v43, %v43
    %v51 = vpack.c.bf16 %v44, %v44
    %v52 = vpack.c.bf16 %v45, %v45
    %v53 = vpack.c.bf16 %v46, %v46
    %v54 = vpack.c.bf16 %v47, %v47
    %v55 = vpack.c.bf16 %v48, %v48
    %v56 = vld [vmem:[#allocation5] sm:$0xf]
    %v57 = vld [vmem:[#allocation5 + $0x4] sm:$0xf]
    %v58 = vld [vmem:[#allocation5 + $0x8] sm:$0xf]
    %v59 = vld [vmem:[#allocation5 + $0xc] sm:$0xf]
    %v60 = vld [vmem:[#allocation5 + $0x10] sm:$0xf]
    %v61 = vld [vmem:[#allocation5 + $0x14] sm:$0xf]
    %v62 = vld [vmem:[#allocation5 + $0x18] sm:$0xf]
    %v63 = vld [vmem:[#allocation5 + $0x1c] sm:$0xf]
    %v64 = vld [vmem:[#allocation5 + $0x20] sm:$0xf]
    %v65 = vld [vmem:[#allocation5 + $0x24] sm:$0xf]
    %v66 = vld [vmem:[#allocation5 + $0x28] sm:$0xf]
    %v67 = vld [vmem:[#allocation5 + $0x2c] sm:$0xf]
    %v68 = vld [vmem:[#allocation5 + $0x30] sm:$0xf]
    %v69 = vld [vmem:[#allocation5 + $0x34] sm:$0xf]
    %v70 = vld [vmem:[#allocation5 + $0x38] sm:$0xf]
    %v71 = vld [vmem:[#allocation5 + $0x3c] sm:$0xf]
    %v72 = vld [vmem:[#allocation5 + $0x40] sm:$0xf]
    %v73 = vld [vmem:[#allocation5 + $0x44] sm:$0xf]
    %v74 = vld [vmem:[#allocation5 + $0x48] sm:$0xf]
    %v75 = vld [vmem:[#allocation5 + $0x4c] sm:$0xf]
    %v76 = vld [vmem:[#allocation5 + $0x50] sm:$0xf]
    %v77 = vld [vmem:[#allocation5 + $0x54] sm:$0xf]
    %v78 = vld [vmem:[#allocation5 + $0x58] sm:$0xf]
    %v79 = vld [vmem:[#allocation5 + $0x5c] sm:$0xf]
    %v80 = vld [vmem:[#allocation5 + $0x60] sm:$0xf]
    %v81 = vld [vmem:[#allocation5 + $0x64] sm:$0xf]
    %v82 = vld [vmem:[#allocation5 + $0x68] sm:$0xf]
    %v83 = vld [vmem:[#allocation5 + $0x6c] sm:$0xf]
    %v84 = vld [vmem:[#allocation5 + $0x70] sm:$0xf]
    %v85 = vld [vmem:[#allocation5 + $0x74] sm:$0xf]
    %v86 = vld [vmem:[#allocation5 + $0x78] sm:$0xf]
    %v87 = vld [vmem:[#allocation5 + $0x7c] sm:$0xf]
    %v88 = vld [vmem:[#allocation5 + $0x80] sm:$0xf]
    %v89 = vld [vmem:[#allocation5 + $0x84] sm:$0xf]
    %v90 = vld [vmem:[#allocation5 + $0x88] sm:$0xf]
    %v91 = vld [vmem:[#allocation5 + $0x8c] sm:$0xf]
    %v92 = vld [vmem:[#allocation5 + $0x90] sm:$0xf]
    %v93 = vld [vmem:[#allocation5 + $0x94] sm:$0xf]
    %v94 = vld [vmem:[#allocation5 + $0x98] sm:$0xf]
    %v95 = vld [vmem:[#allocation5 + $0x9c] sm:$0xf]
    %v96 = vld [vmem:[#allocation5 + $0xa0] sm:$0xf]
    %v97 = vld [vmem:[#allocation5 + $0xa4] sm:$0xf]
    %v98 = vld [vmem:[#allocation5 + $0xa8] sm:$0xf]
    %v99 = vld [vmem:[#allocation5 + $0xac] sm:$0xf]
    %v100 = vld [vmem:[#allocation5 + $0xb0] sm:$0xf]
    %v101 = vld [vmem:[#allocation5 + $0xb4] sm:$0xf]
    %v102 = vld [vmem:[#allocation5 + $0xb8] sm:$0xf]
    %v103 = vld [vmem:[#allocation5 + $0xbc] sm:$0xf]
    %v104 = vld [vmem:[#allocation5 + $0xc0] sm:$0xf]
    %v105 = vld [vmem:[#allocation5 + $0xc4] sm:$0xf]
    %v106 = vld [vmem:[#allocation5 + $0xc8] sm:$0xf]
    %v107 = vld [vmem:[#allocation5 + $0xcc] sm:$0xf]
    %v108 = vld [vmem:[#allocation5 + $0xd0] sm:$0xf]
    %v109 = vld [vmem:[#allocation5 + $0xd4] sm:$0xf]
    %v110 = vld [vmem:[#allocation5 + $0xd8] sm:$0xf]
    %v111 = vld [vmem:[#allocation5 + $0xdc] sm:$0xf]
    %v112 = vld [vmem:[#allocation5 + $0xe0] sm:$0xf]
    %v113 = vld [vmem:[#allocation5 + $0xe4] sm:$0xf]
    %v114 = vld [vmem:[#allocation5 + $0xe8] sm:$0xf]
    %v115 = vld [vmem:[#allocation5 + $0xec] sm:$0xf]
    %v116 = vld [vmem:[#allocation5 + $0xf0] sm:$0xf]
    %v117 = vld [vmem:[#allocation5 + $0xf4] sm:$0xf]
    %v118 = vld [vmem:[#allocation5 + $0xf8] sm:$0xf]
    %v119 = vld [vmem:[#allocation5 + $0xfc] sm:$0xf]
    %v120 = vld [vmem:[#allocation5 + $0x100] sm:$0xf]
    %v121 = vld [vmem:[#allocation5 + $0x104] sm:$0xf]
    %v122 = vld [vmem:[#allocation5 + $0x108] sm:$0xf]
    %v123 = vld [vmem:[#allocation5 + $0x10c] sm:$0xf]
    %v124 = vld [vmem:[#allocation5 + $0x110] sm:$0xf]
    %v125 = vld [vmem:[#allocation5 + $0x114] sm:$0xf]
    %v126 = vld [vmem:[#allocation5 + $0x118] sm:$0xf]
    %v127 = vld [vmem:[#allocation5 + $0x11c] sm:$0xf]
    %v128 = vld [vmem:[#allocation5 + $0x120] sm:$0xf]
    %v129 = vld [vmem:[#allocation5 + $0x124] sm:$0xf]
    %v130 = vld [vmem:[#allocation5 + $0x128] sm:$0xf]
    %v131 = vld [vmem:[#allocation5 + $0x12c] sm:$0xf]
    %v132 = vld [vmem:[#allocation5 + $0x130] sm:$0xf]
    %v133 = vld [vmem:[#allocation5 + $0x134] sm:$0xf]
    %v134 = vld [vmem:[#allocation5 + $0x138] sm:$0xf]
    %v135 = vld [vmem:[#allocation5 + $0x13c] sm:$0xf]
    %v136 = vld [vmem:[#allocation5 + $0x140] sm:$0xf]
    %v137 = vld [vmem:[#allocation5 + $0x144] sm:$0xf]
    %v138 = vld [vmem:[#allocation5 + $0x148] sm:$0xf]
    %v139 = vld [vmem:[#allocation5 + $0x14c] sm:$0xf]
    %v140 = vld [vmem:[#allocation5 + $0x150] sm:$0xf]
    %v141 = vld [vmem:[#allocation5 + $0x154] sm:$0xf]
    %v142 = vld [vmem:[#allocation5 + $0x158] sm:$0xf]
    %v143 = vld [vmem:[#allocation5 + $0x15c] sm:$0xf]
    %v144 = vld [vmem:[#allocation5 + $0x160] sm:$0xf]
    %v145 = vld [vmem:[#allocation5 + $0x164] sm:$0xf]
    %v146 = vld [vmem:[#allocation5 + $0x168] sm:$0xf]
    %v147 = vld [vmem:[#allocation5 + $0x16c] sm:$0xf]
    %v148 = vld [vmem:[#allocation5 + $0x170] sm:$0xf]
    %v149 = vld [vmem:[#allocation5 + $0x174] sm:$0xf]
    %v150 = vld [vmem:[#allocation5 + $0x178] sm:$0xf]
    %v151 = vld [vmem:[#allocation5 + $0x17c] sm:$0xf]
    %v152 = vld [vmem:[#allocation5 + $0x180] sm:$0xf]
    %v153 = vld [vmem:[#allocation5 + $0x184] sm:$0xf]
    %v252 = vunpack.c.l.b16 %v56
    %v253 = vunpack.c.l.b16 %v57
    %v254 = vunpack.c.l.b16 %v58
    %v255 = vunpack.c.l.b16 %v59
    %v256 = vunpack.c.l.b16 %v60
    %v257 = vunpack.c.l.b16 %v61
    %v258 = vunpack.c.l.b16 %v62
    %v259 = vunpack.c.l.b16 %v63
    %v260 = vunpack.c.l.b16 %v64
    %v261 = vunpack.c.l.b16 %v65
    %v262 = vunpack.c.l.b16 %v66
    %v263 = vunpack.c.l.b16 %v67
    %v264 = vunpack.c.l.b16 %v68
    %v265 = vunpack.c.l.b16 %v69
    %v266 = vunpack.c.l.b16 %v70
    %v267 = vunpack.c.l.b16 %v71
    %v268 = vunpack.c.l.b16 %v72
    %v269 = vunpack.c.l.b16 %v73
    %v270 = vunpack.c.l.b16 %v74
    %v271 = vunpack.c.l.b16 %v75
    %v272 = vunpack.c.l.b16 %v76
    %v273 = vunpack.c.l.b16 %v77
    %v274 = vunpack.c.l.b16 %v78
    %v275 = vunpack.c.l.b16 %v79
    %v276 = vunpack.c.l.b16 %v80
    %v277 = vunpack.c.l.b16 %v81
    %v278 = vunpack.c.l.b16 %v82
    %v279 = vunpack.c.l.b16 %v83
    %v280 = vunpack.c.l.b16 %v84
    %v281 = vunpack.c.l.b16 %v85
    %v282 = vunpack.c.l.b16 %v86
    %v283 = vunpack.c.l.b16 %v87
    %v284 = vunpack.c.l.b16 %v88
    %v285 = vunpack.c.l.b16 %v89
    %v286 = vunpack.c.l.b16 %v90
    %v287 = vunpack.c.l.b16 %v91
    %v288 = vunpack.c.l.b16 %v92
    %v289 = vunpack.c.l.b16 %v93
    %v290 = vunpack.c.l.b16 %v94
    %v291 = vunpack.c.l.b16 %v95
    %v292 = vunpack.c.l.b16 %v96
    %v293 = vunpack.c.l.b16 %v97
    %v294 = vunpack.c.l.b16 %v98
    %v295 = vunpack.c.l.b16 %v99
    %v296 = vunpack.c.l.b16 %v100
    %v297 = vunpack.c.l.b16 %v101
    %v298 = vunpack.c.l.b16 %v102
    %v299 = vunpack.c.l.b16 %v103
    %v300 = vunpack.c.l.b16 %v104
    %v301 = vunpack.c.l.b16 %v105
    %v302 = vunpack.c.l.b16 %v106
    %v303 = vunpack.c.l.b16 %v107
    %v304 = vunpack.c.l.b16 %v108
    %v305 = vunpack.c.l.b16 %v109
    %v306 = vunpack.c.l.b16 %v110
    %v307 = vunpack.c.l.b16 %v111
    %v308 = vunpack.c.l.b16 %v112
    %v309 = vunpack.c.l.b16 %v113
    %v310 = vunpack.c.l.b16 %v114
    %v311 = vunpack.c.l.b16 %v115
    %v312 = vunpack.c.l.b16 %v116
    %v313 = vunpack.c.l.b16 %v117
    %v314 = vunpack.c.l.b16 %v118
    %v315 = vunpack.c.l.b16 %v119
    %v316 = vunpack.c.l.b16 %v120
    %v317 = vunpack.c.l.b16 %v121
    %v318 = vunpack.c.l.b16 %v122
    %v319 = vunpack.c.l.b16 %v123
    %v320 = vunpack.c.l.b16 %v124
    %v321 = vunpack.c.l.b16 %v125
    %v322 = vunpack.c.l.b16 %v126
    %v323 = vunpack.c.l.b16 %v127
    %v324 = vunpack.c.l.b16 %v128
    %v325 = vunpack.c.l.b16 %v129
    %v326 = vunpack.c.l.b16 %v130
    %v327 = vunpack.c.l.b16 %v131
    %v328 = vunpack.c.l.b16 %v132
    %v329 = vunpack.c.l.b16 %v133
    %v330 = vunpack.c.l.b16 %v134
    %v331 = vunpack.c.l.b16 %v135
    %v332 = vunpack.c.l.b16 %v136
    %v333 = vunpack.c.l.b16 %v137
    %v334 = vunpack.c.l.b16 %v138
    %v335 = vunpack.c.l.b16 %v139
    %v336 = vunpack.c.l.b16 %v140
    %v337 = vunpack.c.l.b16 %v141
    %v338 = vunpack.c.l.b16 %v142
    %v339 = vunpack.c.l.b16 %v143
    %v340 = vunpack.c.l.b16 %v144
    %v341 = vunpack.c.l.b16 %v145
    %v342 = vunpack.c.l.b16 %v146
    %v343 = vunpack.c.l.b16 %v147
    %v344 = vunpack.c.l.b16 %v148
    %v345 = vunpack.c.l.b16 %v149
    %v346 = vunpack.c.l.b16 %v150
    %v347 = vunpack.c.l.b16 %v151
    %v348 = vunpack.c.l.b16 %v152
    %v349 = vunpack.c.l.b16 %v153
    %v350 = vpack.c.b16 %v253, %v252
    %v351 = vpack.c.b16 %v255, %v254
    %v352 = vpack.c.b16 %v257, %v256
    %v353 = vpack.c.b16 %v259, %v258
    %v354 = vpack.c.b16 %v261, %v260
    %v355 = vpack.c.b16 %v263, %v262
    %v356 = vpack.c.b16 %v265, %v264
    %v357 = vpack.c.b16 %v267, %v266
    %v358 = vpack.c.b16 %v269, %v268
    %v359 = vpack.c.b16 %v271, %v270
    %v360 = vpack.c.b16 %v273, %v272
    %v361 = vpack.c.b16 %v275, %v274
    %v362 = vpack.c.b16 %v277, %v276
    %v363 = vpack.c.b16 %v279, %v278
    %v364 = vpack.c.b16 %v281, %v280
    %v365 = vpack.c.b16 %v283, %v282
    %v366 = vpack.c.b16 %v285, %v284
    %v367 = vpack.c.b16 %v287, %v286
    %v368 = vpack.c.b16 %v289, %v288
    %v369 = vpack.c.b16 %v291, %v290
    %v370 = vpack.c.b16 %v293, %v292
    %v371 = vpack.c.b16 %v295, %v294
    %v372 = vpack.c.b16 %v297, %v296
    %v373 = vpack.c.b16 %v299, %v298
    %v374 = vpack.c.b16 %v301, %v300
    %v375 = vpack.c.b16 %v303, %v302
    %v376 = vpack.c.b16 %v305, %v304
    %v377 = vpack.c.b16 %v307, %v306
    %v378 = vpack.c.b16 %v309, %v308
    %v379 = vpack.c.b16 %v311, %v310
    %v380 = vpack.c.b16 %v313, %v312
    %v381 = vpack.c.b16 %v315, %v314
    %v382 = vpack.c.b16 %v317, %v316
    %v383 = vpack.c.b16 %v319, %v318
    %v384 = vpack.c.b16 %v321, %v320
    %v385 = vpack.c.b16 %v323, %v322
    %v386 = vpack.c.b16 %v325, %v324
    %v387 = vpack.c.b16 %v327, %v326
    %v388 = vpack.c.b16 %v329, %v328
    %v389 = vpack.c.b16 %v331, %v330
    %v390 = vpack.c.b16 %v333, %v332
    %v391 = vpack.c.b16 %v335, %v334
    %v392 = vpack.c.b16 %v337, %v336
    %v393 = vpack.c.b16 %v339, %v338
    %v394 = vpack.c.b16 %v341, %v340
    %v395 = vpack.c.b16 %v343, %v342
    %v396 = vpack.c.b16 %v345, %v344
    %v397 = vpack.c.b16 %v347, %v346
    %v398 = vpack.c.b16 %v349, %v348
    %vm448 = vcmask 130048
    %v450 = vsel %vm448, %v55, 0
    %452 = vmatprep.subr.bf16.mxu0 0
    %453 = vmatpush1.bf16.msra.mxu0 %v350
    %454 = vmatprep.subr.bf16.mxu0 0
    %455 = vmatpush1.bf16.msra.mxu0 %v351
    %456 = vmatprep.subr.bf16.mxu0 0
    %457 = vmatpush1.bf16.msra.mxu0 %v352
    %458 = vmatprep.subr.bf16.mxu0 0
    %459 = vmatpush1.bf16.msra.mxu0 %v353
    %460 = vmatprep.subr.bf16.mxu0 0
    %461 = vmatpush1.bf16.msra.mxu0 %v354
    %462 = vmatprep.subr.bf16.mxu0 0
    %463 = vmatpush1.bf16.msra.mxu0 %v355
    %464 = vmatprep.subr.bf16.mxu0 0
    %465 = vmatpush1.bf16.msra.mxu0 %v356
    %466 = vmatprep.subr.bf16.mxu0 0
    %467 = vmatpush1.bf16.msra.mxu0 %v357
    %468 = vmatprep.subr.bf16.mxu0 0
    %469 = vmatpush1.bf16.msra.mxu0 %v358
    %470 = vmatprep.subr.bf16.mxu0 0
    %471 = vmatpush1.bf16.msra.mxu0 %v359
    %472 = vmatprep.subr.bf16.mxu0 0
    %473 = vmatpush1.bf16.msra.mxu0 %v360
    %474 = vmatprep.subr.bf16.mxu0 0
    %475 = vmatpush1.bf16.msra.mxu0 %v361
    %476 = vmatprep.subr.bf16.mxu0 0
    %477 = vmatpush1.bf16.msra.mxu0 %v362
    %478 = vmatprep.subr.bf16.mxu0 0
    %479 = vmatpush1.bf16.msra.mxu0 %v363
    %480 = vmatprep.subr.bf16.mxu0 0
    %481 = vmatpush1.bf16.msra.mxu0 %v364
    %482 = vmatprep.subr.bf16.mxu0 0
    %483 = vmatpush1.bf16.msra.mxu0 %v365
    %484 = vmatprep.mubr.bf16.mxu0 %v50
    %485 = vmatmul.mubr.bf16.gmra.mrb[0].mxu0 %v49
    %v486 = vpop.f32.mrb[0].mxu0
    %v487 = vadd.f32 0.0, %v486
    %v488 = vpop.f32.mrb[0].mxu0
    %v489 = vpop.f32.mrb[0].mxu0
    %v490 = vpop.f32.mrb[0].mxu0
    %491 = vdwg.mxu0
    %492 = vmatprep.subr.bf16.mxu0 0
    %493 = vmatpush1.bf16.msra.mxu0 %v366
    %494 = vmatprep.subr.bf16.mxu0 0
    %495 = vmatpush1.bf16.msra.mxu0 %v367
    %496 = vmatprep.subr.bf16.mxu0 0
    %497 = vmatpush1.bf16.msra.mxu0 %v368
    %498 = vmatprep.subr.bf16.mxu0 0
    %499 = vmatpush1.bf16.msra.mxu0 %v369
    %500 = vmatprep.subr.bf16.mxu0 0
    %501 = vmatpush1.bf16.msra.mxu0 %v370
    %502 = vmatprep.subr.bf16.mxu0 0
    %503 = vmatpush1.bf16.msra.mxu0 %v371
    %504 = vmatprep.subr.bf16.mxu0 0
    %505 = vmatpush1.bf16.msra.mxu0 %v372
    %506 = vmatprep.subr.bf16.mxu0 0
    %507 = vmatpush1.bf16.msra.mxu0 %v373
    %508 = vmatprep.subr.bf16.mxu0 0
    %509 = vmatpush1.bf16.msra.mxu0 %v374
    %510 = vmatprep.subr.bf16.mxu0 0
    %511 = vmatpush1.bf16.msra.mxu0 %v375
    %512 = vmatprep.subr.bf16.mxu0 0
    %513 = vmatpush1.bf16.msra.mxu0 %v376
    %514 = vmatprep.subr.bf16.mxu0 0
    %515 = vmatpush1.bf16.msra.mxu0 %v377
    %516 = vmatprep.subr.bf16.mxu0 0
    %517 = vmatpush1.bf16.msra.mxu0 %v378
    %518 = vmatprep.subr.bf16.mxu0 0
    %519 = vmatpush1.bf16.msra.mxu0 %v379
    %520 = vmatprep.subr.bf16.mxu0 0
    %521 = vmatpush1.bf16.msra.mxu0 %v380
    %522 = vmatprep.subr.bf16.mxu0 0
    %523 = vmatpush1.bf16.msra.mxu0 %v381
    %524 = vmatprep.mubr.bf16.mxu0 %v52
    %525 = vmatmul.mubr.bf16.gmra.mrb[0].mxu0 %v51
    %v526 = vpop.f32.mrb[0].mxu0
    %v527 = vadd.f32 %v487, %v526
    %v528 = vpop.f32.mrb[0].mxu0
    %v529 = vpop.f32.mrb[0].mxu0
    %v530 = vpop.f32.mrb[0].mxu0
    %531 = vdwg.mxu0
    %532 = vmatprep.subr.bf16.mxu0 0
    %533 = vmatpush1.bf16.msra.mxu0 %v382
    %534 = vmatprep.subr.bf16.mxu0 0
    %535 = vmatpush1.bf16.msra.mxu0 %v383
    %536 = vmatprep.subr.bf16.mxu0 0
    %537 = vmatpush1.bf16.msra.mxu0 %v384
    %538 = vmatprep.subr.bf16.mxu0 0
    %539 = vmatpush1.bf16.msra.mxu0 %v385
    %540 = vmatprep.subr.bf16.mxu0 0
    %541 = vmatpush1.bf16.msra.mxu0 %v386
    %542 = vmatprep.subr.bf16.mxu0 0
    %543 = vmatpush1.bf16.msra.mxu0 %v387
    %544 = vmatprep.subr.bf16.mxu0 0
    %545 = vmatpush1.bf16.msra.mxu0 %v388
    %546 = vmatprep.subr.bf16.mxu0 0
    %547 = vmatpush1.bf16.msra.mxu0 %v389
    %548 = vmatprep.subr.bf16.mxu0 0
    %549 = vmatpush1.bf16.msra.mxu0 %v390
    %550 = vmatprep.subr.bf16.mxu0 0
    %551 = vmatpush1.bf16.msra.mxu0 %v391
    %552 = vmatprep.subr.bf16.mxu0 0
    %553 = vmatpush1.bf16.msra.mxu0 %v392
    %554 = vmatprep.subr.bf16.mxu0 0
    %555 = vmatpush1.bf16.msra.mxu0 %v393
    %556 = vmatprep.subr.bf16.mxu0 0
    %557 = vmatpush1.bf16.msra.mxu0 %v394
    %558 = vmatprep.subr.bf16.mxu0 0
    %559 = vmatpush1.bf16.msra.mxu0 %v395
    %560 = vmatprep.subr.bf16.mxu0 0
    %561 = vmatpush1.bf16.msra.mxu0 %v396
    %562 = vmatprep.subr.bf16.mxu0 0
    %563 = vmatpush1.bf16.msra.mxu0 %v397
    %564 = vmatprep.mubr.bf16.mxu0 %v54
    %565 = vmatmul.mubr.bf16.gmra.mrb[0].mxu0 %v53
    %v566 = vpop.f32.mrb[0].mxu0
    %v567 = vadd.f32 %v527, %v566
    %v568 = vpop.f32.mrb[0].mxu0
    %v569 = vpop.f32.mrb[0].mxu0
    %v570 = vpop.f32.mrb[0].mxu0
    %571 = vdwg.mxu0
    %572 = vmatprep.subr.bf16.mxu0 0
    %573 = vmatpush1.bf16.msra.mxu0 %v398
    %574 = vmatprep.subr.bf16.mxu0 0
    %575 = vmatpush1.bf16.msra.mxu0 0
    %576 = vmatprep.subr.bf16.mxu0 0
    %577 = vmatpush1.bf16.msra.mxu0 0
    %578 = vmatprep.subr.bf16.mxu0 0
    %579 = vmatpush1.bf16.msra.mxu0 0
    %580 = vmatprep.subr.bf16.mxu0 0
    %581 = vmatpush1.bf16.msra.mxu0 0
    %582 = vmatprep.subr.bf16.mxu0 0
    %583 = vmatpush1.bf16.msra.mxu0 0
    %584 = vmatprep.subr.bf16.mxu0 0
    %585 = vmatpush1.bf16.msra.mxu0 0
    %586 = vmatprep.subr.bf16.mxu0 0
    %587 = vmatpush1.bf16.msra.mxu0 0
    %588 = vmatprep.subr.bf16.mxu0 0
    %589 = vmatpush1.bf16.msra.mxu0 0
    %590 = vmatprep.subr.bf16.mxu0 0
    %591 = vmatpush1.bf16.msra.mxu0 0
    %592 = vmatprep.subr.bf16.mxu0 0
    %593 = vmatpush1.bf16.msra.mxu0 0
    %594 = vmatprep.subr.bf16.mxu0 0
    %595 = vmatpush1.bf16.msra.mxu0 0
    %596 = vmatprep.subr.bf16.mxu0 0
    %597 = vmatpush1.bf16.msra.mxu0 0
    %598 = vmatprep.subr.bf16.mxu0 0
    %599 = vmatpush1.bf16.msra.mxu0 0
    %600 = vmatprep.subr.bf16.mxu0 0
    %601 = vmatpush1.bf16.msra.mxu0 0
    %602 = vmatprep.subr.bf16.mxu0 0
    %603 = vmatpush1.bf16.msra.mxu0 0
    %604 = vmatprep.mubr.bf16.mxu0 0
    %605 = vmatmul.mubr.bf16.gmra.mrb[0].mxu0 %v450
    %v606 = vpop.f32.mrb[0].mxu0
    %v607 = vadd.f32 %v567, %v606
    %v608 = vpop.f32.mrb[0].mxu0
    %v609 = vpop.f32.mrb[0].mxu0
    %v610 = vpop.f32.mrb[0].mxu0
    %611 = vdwg.mxu0
    %v612 = vld [vmem:[%s2] sm:$0x1]
    %v614 = vlaneseq
    %v615 = vshrl.u32 %v614, 7
    %v616 = vsub.s32 0, %v615
    %v617 = vrot.slane %v612, %v616
    %v619 = vadd.f32 %v607, %v617
    %620 = vst.msk [vmem:[#allocation7] sm:$0xff] %vm448, %v619
    // Predicated region
    $region22: #{tpu_custom_call.1} parent=1 // pred_check
      _
    $region23: #{tpu_custom_call.1} parent=1 // pred_check_branch
      %622 = sbr.rel (0) target = $region25
    $region24: #{tpu_custom_call.1} parent=1 // pred_region
      %s624 = ssub.s32 128, 128
      %625 = vsyncadd [#allocation4], %s624
      %s627 = sshll.u32 [#allocation7], 4
      %s628 = int_to_ptr.vmem [resolvable:$true] %s627
      %630 = dma.vmem_to_hbm [thread:$0]  %s628, 128, %s3, [#allocation4]
    $region25: #{tpu_custom_call.1} parent=1 // pred_fallthru
      _
    // Predicated region
    $region26: #{tpu_custom_call.1} parent=1 // pred_check
      _
    $region27: #{tpu_custom_call.1} parent=1 // pred_check_branch
      %632 = sbr.rel (0) target = $region29
    $region28: #{tpu_custom_call.1} parent=1 // pred_region
      %633 = dma.done [#allocation4], 128
    $region29: #{tpu_custom_call.1} parent=1 // pred_fallthru
      _
    %634 = vsyncpa [#allocation3], 1
    %635 = vsyncpa [#allocation6], 1
    %636 = vsyncpa [#allocation4], 1

</llo_original>
